<compile_context>
chip_gen: v7x
topology: tpu7x:2x2x1
jax: 0.10.0
libtpu: 0.0.40
codegen_flags: <defaults>
</compile_context>

<pallas_src>
import functools

import jax
import jax.numpy as jnp
from jax.experimental import pallas as pl
from jax.experimental.pallas import tpu as pltpu


def _identity(v):
    return v


# ----------------------------------------------------------------------------
# Layout / tiling helpers (all static Python).
# ----------------------------------------------------------------------------
def _choose_layout(N, D):
    """Pick a lane-dense (rows, lanes) reshape of the flat (N*D,) token slab."""
    total = N * D
    for lanes in (1024, 512, 256, 128):
        if total % lanes == 0:
            return total // lanes, lanes
    # Fallback: keep D as the lane axis (may be < 128 -> masked stores, but
    # correctness is preserved and the block still equals the full array dims).
    return N, D


def _choose_block_rows(R, L, itemsize):
    """~1 MiB per block buffer; row count a multiple of 8 (or the full extent)."""
    if R <= 8:
        return R
    target = max(8, (1 << 20) // (L * itemsize))
    tr = min(R, target)
    if tr >= R:
        return R
    return max(8, (tr // 8) * 8)


def _check_shape_preserving(f, shape, dtype, name):
    if f is _identity:
        return
    out = jax.eval_shape(f, jax.ShapeDtypeStruct(shape, dtype))
    if out.shape != tuple(shape):
        raise ValueError(
            f"{name} must be elementwise/shape-preserving to be fused; "
            f"got output shape {out.shape} for input {tuple(shape)}")


# ----------------------------------------------------------------------------
# Kernels.
# ----------------------------------------------------------------------------
def _make_uniform_kernel(fn):
    """Same elementwise fn on every position (token_num==0, fn is token_fn, ...)."""
    def kernel(x_ref, o_ref):
        o_ref[...] = fn(x_ref[...]).astype(o_ref.dtype)
    return kernel


def _make_masked_kernel(first_fn, second_fn, split_elems, TR, L, num_tiles):
    """first_fn on flat elements [0, split_elems), second_fn on the rest.

    Pure tiles run a single fn; only the boundary tile evaluates both under a
    mask. All classification constants are static Python, so dead branches are
    not even emitted.
    """
    tile_elems = TR * L
    b_idx = split_elems // tile_elems           # tile containing the boundary
    clean = (split_elems % tile_elems) == 0     # boundary falls on a tile edge
    second_start = b_idx if clean else b_idx + 1

    def kernel(x_ref, o_ref):
        n = pl.program_id(1)

        if b_idx > 0:
            @pl.when(n < b_idx)                 # pure first-kind tiles
            def _():
                o_ref[...] = first_fn(x_ref[...]).astype(o_ref.dtype)

        if second_start < num_tiles:
            @pl.when(n >= second_start)         # pure second-kind tiles
            def _():
                o_ref[...] = second_fn(x_ref[...]).astype(o_ref.dtype)

        if not clean:
            @pl.when(n == b_idx)                # the single boundary tile
            def _():
                x = x_ref[...]
                # Mask from small iotas (sublane column + lane row), broadcast
                # instead of materializing a full-tile int32 iota per element.
                row = jax.lax.broadcasted_iota(jnp.int32, (1, TR, 1), 1)
                lane = jax.lax.broadcasted_iota(jnp.int32, (1, 1, L), 2)
                flat = (n * TR + row) * L + lane          # (1, TR, L)
                out = jnp.where(flat < split_elems, first_fn(x), second_fn(x))
                o_ref[...] = out.astype(o_ref.dtype)

    return kernel


# ----------------------------------------------------------------------------
# Wrapper.
# ----------------------------------------------------------------------------
def token_fn_context(x, *, token_num=0, inverse=False,
                     fn=_identity, token_fn=_identity, block_rows=None):
    """Pallas implementation of TokenFnContext.forward for [B, N, D] inputs."""
    B, N, D = x.shape
    if not (0 <= token_num <= N):
        raise ValueError(f"token_num must be in [0, {N}], got {token_num}")

    # Decide which elementwise fn applies to the leading / trailing part of the
    # sequence and where the split falls (in sequence positions).
    split = None
    if token_num == 0:
        uniform, uniform_fn = True, fn                        # fn(x) everywhere
    else:
        if not inverse:
            first_fn, second_fn, split = token_fn, fn, token_num
        else:
            first_fn, second_fn, split = fn, token_fn, N - token_num
        if fn is token_fn:
            uniform, uniform_fn = True, fn
        elif split == N:
            uniform, uniform_fn = True, first_fn
        elif split == 0:
            uniform, uniform_fn = True, second_fn
        else:
            uniform = False

    # Default nn.Identity path: pure copy -> skip the kernel (and HBM traffic).
    if uniform and uniform_fn is _identity:
        return x

    # Lane-dense layout + row tiling.
    R, L = _choose_layout(N, D)
    itemsize = jnp.dtype(x.dtype).itemsize
    TR = _choose_block_rows(R, L, itemsize) if block_rows is None else block_rows
    TR = min(TR, R)
    if TR != R and TR % 8 != 0:
        TR = max(8, (TR // 8) * 8)
    num_tiles = pl.cdiv(R, TR)

    tile_shape = (1, TR, L)
    if uniform:
        _check_shape_preserving(uniform_fn, tile_shape, x.dtype, "fn")
        kernel = _make_uniform_kernel(uniform_fn)
    else:
        _check_shape_preserving(fn, tile_shape, x.dtype, "fn")
        _check_shape_preserving(token_fn, tile_shape, x.dtype, "token_fn")
        kernel = _make_masked_kernel(first_fn, second_fn, split * D, TR, L,
                                     num_tiles)

    x2 = x.reshape(B, R, L)   # row-major reshape: layout plumbing outside kernel
    out2 = pl.pallas_call(
        kernel,
        out_shape=jax.ShapeDtypeStruct((B, R, L), x.dtype),
        grid=(B, num_tiles),
        in_specs=[pl.BlockSpec((1, TR, L), lambda b, n: (b, n, 0))],
        out_specs=pl.BlockSpec((1, TR, L), lambda b, n: (b, n, 0)),
        compiler_params=pltpu.CompilerParams(
            # Both grid axes are independent -> shard across both TCs on v7x.
            dimension_semantics=("parallel", "parallel")),
    )(x2)
    return out2.reshape(B, N, D)


# ----------------------------------------------------------------------------
# Pure-JAX reference mirroring the PyTorch code path literally
# (TokenFilter slicing + torch.cat), for correctness checking.
# ----------------------------------------------------------------------------
def token_fn_context_ref(x, *, token_num=0, inverse=False,
                         fn=_identity, token_fn=_identity, **_):
    N = x.shape[1]
    if inverse:
        tokens = x[:, N - token_num:, :]
        features = x[:, :N - token_num, :]
    else:
        tokens = x[:, :token_num, :]
        features = x[:, token_num:, :]
    features = fn(features)
    if token_num == 0:
        return features
    tokens = token_fn(tokens)
    if inverse:
        return jnp.concatenate([features, tokens], axis=1)
    return jnp.concatenate([tokens, features], axis=1)


if __name__ == "__main__":
    key = jax.random.PRNGKey(0)
    k1, k2, k3 = jax.random.split(key, 3)

    double = lambda v: v * 2.0
    plus1 = lambda v: v + 1.0

    # Primary small shape consistent with the module: batch=2, seq=8, hidden=32.
    x_small = jax.random.normal(k1, (2, 8, 32), dtype=jnp.float32)
    # Multi-tile shape (forces >1 sequence tile -> exercises pl.when branches).
    x_mid = jax.random.normal(k2, (2, 128, 128), dtype=jnp.float32)
    # Shape whose N*D is not a multiple of 128 -> fallback (N, D) layout.
    x_odd = jax.random.normal(k3, (2, 8, 24), dtype=jnp.float32)

    cases = [
        # (input, module config, kernel-only tiling overrides)
        (x_small, dict(token_num=1, inverse=False, fn=double, token_fn=plus1), {}),
        (x_small, dict(token_num=2, inverse=True, fn=double, token_fn=plus1), {}),
        (x_small, dict(token_num=0, inverse=False, fn=double, token_fn=plus1), {}),
        (x_small, dict(token_num=1, inverse=False), {}),                   # identity fast path
        (x_small, dict(token_num=2, inverse=False, fn=double, token_fn=double), {}),  # uniform fn
        (x_mid, dict(token_num=3, inverse=False, fn=double, token_fn=plus1),
         dict(block_rows=8)),
        (x_mid, dict(token_num=3, inverse=True, fn=double, token_fn=plus1),
         dict(block_rows=8)),
        (x_odd, dict(token_num=1, inverse=False, fn=double, token_fn=plus1), {}),
    ]

    for x, cfg, extra in cases:
        run = jax.jit(functools.partial(token_fn_context, **cfg, **extra))
        out = jax.block_until_ready(run(x))
        ref = token_fn_context_ref(x, **cfg)
        assert out.shape == ref.shape, (out.shape, ref.shape, cfg)
        assert jnp.allclose(out, ref, atol=1e-5, rtol=1e-5), (cfg, extra)

    print("KERNEL_OK")
</pallas_src>

<mosaic_0001>
module attributes {stable_mosaic.version = 11 : i64} {
  func.func @kernel(%arg0: i32, %arg1: i32, %arg2: memref<1x1x256xf32, #tpu.memory_space<vmem>>, %arg3: memref<1x1x256xf32, #tpu.memory_space<vmem>>) attributes {dimension_semantics = [#tpu.dimension_semantics<parallel>, #tpu.dimension_semantics<parallel>], iteration_bounds = array<i64: 2, 1>, scalar_prefetch = 0 : i64, scratch_operands = 0 : i64, tpu.core_type = #tpu.core_type<tc>, window_params = [{transform_indices = @transform_0, window_bounds = array<i64: 1, 1, 256>}, {transform_indices = @transform_1, window_bounds = array<i64: 1, 1, 256>}]} {
    %c0_i32 = arith.constant 0 : i32
    %0 = arith.cmpi eq, %arg1, %c0_i32 : i32
    %1 = arith.extui %0 : i1 to i32
    %c0_i32_0 = arith.constant 0 : i32
    %2 = arith.cmpi ne, %1, %c0_i32_0 : i32
    scf.if %2 {
      %c0 = arith.constant 0 : index
      %c0_1 = arith.constant 0 : index
      %c0_2 = arith.constant 0 : index
      %3 = vector.load %arg2[%c0, %c0_1, %c0_2] : memref<1x1x256xf32, #tpu.memory_space<vmem>>, vector<1x1x256xf32>
      %4 = tpu.iota {dimensions = array<i32: 1>} : vector<1x1x1xi32>
      %5 = tpu.iota {dimensions = array<i32: 2>} : vector<1x1x256xi32>
      %c1_i32 = arith.constant 1 : i32
      %6 = arith.muli %arg1, %c1_i32 : i32
      %7 = vector.broadcast %6 : i32 to vector<1x1x1xi32>
      %8 = arith.addi %7, %4 : vector<1x1x1xi32>
      %c256_i32 = arith.constant 256 : i32
      %9 = vector.broadcast %c256_i32 : i32 to vector<1x1x1xi32>
      %10 = arith.muli %8, %9 : vector<1x1x1xi32>
      %11 = vector.broadcast %10 : vector<1x1x1xi32> to vector<1x1x256xi32>
      %12 = arith.addi %11, %5 : vector<1x1x256xi32>
      %c32_i32 = arith.constant 32 : i32
      %13 = vector.broadcast %c32_i32 : i32 to vector<1x1x256xi32>
      %14 = arith.cmpi slt, %12, %13 : vector<1x1x256xi32>
      %cst = arith.constant 1.000000e+00 : f32
      %15 = vector.broadcast %cst : f32 to vector<1x1x256xf32>
      %16 = arith.addf %3, %15 : vector<1x1x256xf32>
      %cst_3 = arith.constant 2.000000e+00 : f32
      %17 = vector.broadcast %cst_3 : f32 to vector<1x1x256xf32>
      %18 = arith.mulf %3, %17 : vector<1x1x256xf32>
      %19 = arith.select %14, %16, %18 : vector<1x1x256xi1>, vector<1x1x256xf32>
      %c0_4 = arith.constant 0 : index
      %c0_5 = arith.constant 0 : index
      %c0_6 = arith.constant 0 : index
      %20 = vector.load %arg3[%c0_4, %c0_5, %c0_6] : memref<1x1x256xf32, #tpu.memory_space<vmem>>, vector<1x1x256xf32>
      tpu.vector_store %arg3[%c0_4, %c0_5, %c0_6], %19 {strides = array<i32>} : memref<1x1x256xf32, #tpu.memory_space<vmem>>, vector<1x1x256xf32>,
    } else {
    }
    return
  }
  func.func @transform_0(%arg0: i32, %arg1: i32) -> (i32, i32, i32) {
    %c0_i32 = arith.constant 0 : i32
    %c0_i32_0 = arith.constant 0 : i32
    return %arg0, %arg1, %c0_i32 : i32, i32, i32
  }
  func.func @transform_1(%arg0: i32, %arg1: i32) -> (i32, i32, i32) {
    %c0_i32 = arith.constant 0 : i32
    %c0_i32_0 = arith.constant 0 : i32
    return %arg0, %arg1, %c0_i32 : i32, i32, i32
  }
}

</mosaic_0001>

<llo_original>
// kernel: token_fn_context.1
$region0: #{token_fn_context.1}
  #allocation0 [shape = 'u32[]', space=smem, size = 0x4, offset = 0x4, fixed_abs, tag = 'smem constant byte address 0x4 - core index']
  #allocation1 [shape = 'u32[144,128]{1,0:T(1,128)}', space=vmem, size = 0x12000, scoped, tag = 'internal scratch']
  %s0 = inlined_call_operand.vmem [shape: f32[2,1,256], index: 0, kind: input, shape index: {}]
  %s1 = inlined_call_operand.vmem [shape: f32[2,1,256], index: 1, kind: output, shape index: {}]
  %s2 = sld [smem:[#allocation0]]
  $region41: #{token_fn_context.1} parent=0
    _
  %s4 = ssub.s32 1, %s2
  %s5 = scalar_select 0, %s4, %s2
  loop: start=0, step=1, limit=4
  $region2: #{token_fn_context.1} parent=0 // loop_pre_header
    _
  $region3: #{token_fn_context.1} parent=0 // loop_header
    %s7 = sphi 0, %s11
    %p8 = scmp.ge.s32.totalorder %s7, 4
    %s14 = sphi 0, %s26
    %s15 = sphi 0, %s22
    %s16 = sphi 0, %s14
    %s17 = sphi 0, %s15
    %s18 = sphi 0, %s16
    %s19 = sphi 0, %s17
    %s31 = sphi 0, %s33
    %s34 = sphi 0, %s31
    %s35 = sphi 0, %s34
    %s51 = sphi 0, %s35
    %s59 = sphi 0, %s61
    %s62 = sphi 0, %s59
    %s63 = sphi 0, %s62
    %s79 = sphi 0, %s63
  $region4: #{token_fn_context.1} parent=0 // loop_header_branch
    %10 = sbr.rel (%p8) target = $region8
  $region5: #{token_fn_context.1} parent=0 // loop_body
    %s12 = ssub.s32 %s7, 1
    %s13 = ssub.s32 %s7, 2
    %s20 = sadd.s32 1, %s15
    %p21 = scmp.ge.s32.totalorder %s20, 1
    %s22 = scalar_select %p21, 0, %s20
    %s23 = sadd.s32 1, %s14
    %s24 = scalar_select %p21, %s23, %s14
    %p25 = scmp.ge.s32.totalorder %s24, 2
    %s26 = scalar_select %p25, 0, %s24
    %s27 = ssub.s32 %s14, %s26
    %s28 = ssub.s32 %s15, %s22
    %s29 = sor.u32 %s27, %s28
    %p30 = scmp.eq.s32.totalorder %s29, 0
    %s32 = sadd.s32 %s31, 1
    %s33 = scalar_select %p30, %s31, %s32
    %p36 = pneg %p30
    %p37 = scmp.eq.s32.totalorder %s7, 1
    %p38 = por %p36, %p37
    %p39 = scmp.ne.s32.totalorder %s31, %s34
    %p40 = scmp.eq.s32.totalorder %s7, 0
    %p41 = por %p39, %p40
    %p42 = scmp.ne.s32.totalorder %s31, %s34
    %p43 = scmp.eq.s32.totalorder %s12, 1
    %p44 = por %p42, %p43
    %p45 = scmp.ne.s32.totalorder %s34, %s35
    %p46 = scmp.eq.s32.totalorder %s12, 0
    %p47 = por %p45, %p46
    %p48 = scmp.ne.s32.totalorder %s34, %s35
    %p49 = scmp.eq.s32.totalorder %s13, 1
    %p50 = por %p48, %p49
    %p52 = scmp.ne.s32.totalorder %s35, %s51
    %p53 = scmp.eq.s32.totalorder %s13, 0
    %p54 = por %p52, %p53
    %s55 = ssub.s32 %s14, %s26
    %s56 = ssub.s32 %s15, %s22
    %s57 = sor.u32 %s55, %s56
    %p58 = scmp.eq.s32.totalorder %s57, 0
    %s60 = sadd.s32 %s59, 1
    %s61 = scalar_select %p58, %s59, %s60
    %p64 = pneg %p58
    %p65 = scmp.eq.s32.totalorder %s7, 1
    %p66 = por %p64, %p65
    %p67 = scmp.ne.s32.totalorder %s59, %s62
    %p68 = scmp.eq.s32.totalorder %s7, 0
    %p69 = por %p67, %p68
    %p70 = scmp.ne.s32.totalorder %s59, %s62
    %p71 = scmp.eq.s32.totalorder %s12, 1
    %p72 = por %p70, %p71
    %p73 = scmp.ne.s32.totalorder %s62, %s63
    %p74 = scmp.eq.s32.totalorder %s12, 0
    %p75 = por %p73, %p74
    %p76 = scmp.ne.s32.totalorder %s62, %s63
    %p77 = scmp.eq.s32.totalorder %s13, 1
    %p78 = por %p76, %p77
    %p80 = scmp.ne.s32.totalorder %s63, %s79
    %p81 = scmp.eq.s32.totalorder %s13, 0
    %p82 = por %p80, %p81
    %p83 = scmp.le.s32.totalorder 1, %s7
    %p84 = scmp.lt.s32.totalorder %s7, 3
    %p85 = pnand %p83, %p84
    %p86 = pneg %p85
    // Predicated region
    $region9: #{token_fn_context.1} parent=5 // pred_check
      _
    $region10: #{token_fn_context.1} parent=5 // pred_check_branch
      %88 = sbr.rel (%p85) target = $region12
    $region11: #{token_fn_context.1} parent=5 // pred_region
      %s89 = ssub.s32 %s7, 1
    $region12: #{token_fn_context.1} parent=5 // pred_fallthru
      _
    %p90 = scmp.lt.s32.totalorder %s7, 2
    // Predicated region
    $region13: #{token_fn_context.1} parent=5 // pred_check
      %p91 = pneg %p90
    $region14: #{token_fn_context.1} parent=5 // pred_check_branch
      %93 = sbr.rel (%p91) target = $region16
    $region15: #{token_fn_context.1} parent=5 // pred_region
      // Predicated region
      $region17: #{token_fn_context.1} parent=15 // pred_check
        %p94 = pneg %p41
      $region18: #{token_fn_context.1} parent=15 // pred_check_branch
        %96 = sbr.rel (%p94) target = $region20
      $region19: #{token_fn_context.1} parent=15 // pred_region
        %p97 = scmp.lt.s32.totalorder %s14, 1
        %s98 = scalar_select %p97, %s14, 1
        %p99 = scmp.lt.s32.totalorder %s15, 0
        %s100 = scalar_select %p99, %s15, 0
        %s101 = smul.addr %s100, 2
        %s102 = smul.addr %s98, 2
        %s103 = sadd.s32 %s101, %s102
        %s104 = scalar_lea.vmem %s0, %s103
      $region20: #{token_fn_context.1} parent=15 // pred_fallthru
        _
    $region16: #{token_fn_context.1} parent=5 // pred_fallthru
      _
    %p105 = scmp.le.s32.totalorder 1, %s7
    %p106 = scmp.lt.s32.totalorder %s7, 3
    %p107 = pnand %p105, %p106
    %p108 = pneg %p107
    // Predicated region
    $region21: #{token_fn_context.1} parent=5 // pred_check
      _
    $region22: #{token_fn_context.1} parent=5 // pred_check_branch
      %110 = sbr.rel (%p107) target = $region24
    $region23: #{token_fn_context.1} parent=5 // pred_region
      %s111 = ssub.s32 %s7, 1
      %p112 = scmp.lt.s32.totalorder %s16, 1
      %s113 = scalar_select %p112, %s16, 1
      %p114 = scmp.lt.s32.totalorder %s17, 0
      %s115 = scalar_select %p114, %s17, 0
      %s116 = smul.addr %s115, 2
      %s117 = smul.addr %s113, 2
      %s118 = sadd.s32 %s116, %s117
      %s119 = scalar_lea.vmem %s0, %s118
      %p120 = pneg %p47
      %p121 = pneg %p44
      %p122 = pneg %p75
      %p123 = pneg %p72
      %p124 = scmp.lt.s32.totalorder %s16, 1
      %s125 = scalar_select %p124, %s16, 1
      %p126 = scmp.lt.s32.totalorder %s17, 0
      %s127 = scalar_select %p126, %s17, 0
      %s128 = smul.addr %s127, 2
      %s129 = smul.addr %s125, 2
      %s130 = sadd.s32 %s128, %s129
      %s131 = scalar_lea.vmem %s1, %s130
      %p132 = scmp.lt.s32.totalorder %s16, 1
      %s133 = scalar_select %p132, %s16, 1
      %p134 = scmp.lt.s32.totalorder %s17, 0
      %s135 = scalar_select %p134, %s17, 0
      %s136 = smul.addr %s135, 2
      %s137 = smul.addr %s133, 2
      %s138 = sadd.s32 %s136, %s137
      %s139 = scalar_lea.vmem %s0, %s138
      %p140 = scmp.lt.s32.totalorder %s16, 1
      %s141 = scalar_select %p140, %s16, 1
      %p142 = scmp.lt.s32.totalorder %s17, 0
      %s143 = scalar_select %p142, %s17, 0
      %s144 = smul.addr %s143, 2
      %s145 = smul.addr %s141, 2
      %s146 = sadd.s32 %s144, %s145
      %s147 = scalar_lea.vmem %s1, %s146
      %p148 = scmp.eq.s32.totalorder %s17, 0
      // Predicated region
      $region25: #{token_fn_context.1} parent=23 // pred_check
        %p149 = pneg %p148
      $region26: #{token_fn_context.1} parent=23 // pred_check_branch
        %151 = sbr.rel (%p149) target = $region28
      $region27: #{token_fn_context.1} parent=23 // pred_region
        %v152 = vld [vmem:[%s139] sm:$0x3]
        %v153 = vlaneseq
        %v154 = vshrl.u32 %v153, 7
        %v155 = vlaneseq
        %v156 = vand.u32 %v155, 127
        %v157 = vadd.s32 %v156, 128
        %v158 = vstv %s17
        %v159 = vadd.s32 %v158, %v154
        %v160 = vmul.u32 %v159, 256
        %v161 = vadd.s32 %v160, %v156
        %v162 = vadd.s32 %v160, %v157
        %vm163 = vcmp.lt.s32.totalorder %v161, 32
        %vm164 = vcmp.lt.s32.totalorder %v162, 32
        %v165 = vadd.f32 %v152, 1.0
        %v166 = vmul.f32 %v152, 2.0
        %v168 = vlaneseq
        %v169 = vshrl.u32 %v168, 7
        %v170 = vsub.s32 0, %v169
        %v171 = vrot.slane %v165, %v170
        %v172 = vlaneseq
        %v173 = vshrl.u32 %v172, 7
        %v174 = vsub.s32 1, %v173
        %v175 = vrot.slane %v165, %v174
        %v179 = vlaneseq
        %v180 = vshrl.u32 %v179, 7
        %v181 = vsub.s32 0, %v180
        %v182 = vrot.slane %v166, %v181
        %v183 = vlaneseq
        %v184 = vshrl.u32 %v183, 7
        %v185 = vsub.s32 1, %v184
        %v186 = vrot.slane %v166, %v185
        %v189 = vsel %vm163, %v171, %v182
        %v190 = vsel %vm164, %v175, %v186
        %v193 = vcombine.low %v189, %v190
        %v195 = vunpack.c.l.s4 1966171168
        %v196 = vunpack.c.0.s8 %v195
        %v197 = vlaneseq
        %v198 = vshrl.u32 %v197, 7
        %v199 = vsub.s32 %v196, %v198
        %v200 = vrot.slane %v193, %v199
        %v202 = vunpack.c.l.s4 1966171168
        %v203 = vunpack.c.0.s8 %v202
        %v204 = vlaneseq
        %v205 = vshrl.u32 %v204, 7
        %v206 = vsub.s32 %v203, %v205
        %v207 = vrot.slane %v200, %v206
        %v209 = vlaneseq
        %vm210 = vcmp.ge.s32.totalorder %v209, 0
        %vm211 = vcmp.lt.s32.totalorder %v209, 256
        %vm212 = vmand %vm210, %vm211
        %213 = vst.msk [vmem:[%s147] sm:$0x3] %vm212, %v207
      $region28: #{token_fn_context.1} parent=23 // pred_fallthru
        _
      %p214 = scmp.lt.s32.totalorder %s16, 1
      %s215 = scalar_select %p214, %s16, 1
      %p216 = scmp.lt.s32.totalorder %s17, 0
      %s217 = scalar_select %p216, %s17, 0
      %s218 = smul.addr %s217, 2
      %s219 = smul.addr %s215, 2
      %s220 = sadd.s32 %s218, %s219
      %s221 = scalar_lea.vmem %s1, %s220
      // Predicated region
      $region29: #{token_fn_context.1} parent=23 // pred_check
        %p222 = pneg %p72
      $region30: #{token_fn_context.1} parent=23 // pred_check_branch
        %224 = sbr.rel (%p222) target = $region32
      $region31: #{token_fn_context.1} parent=23 // pred_region
        _
      $region32: #{token_fn_context.1} parent=23 // pred_fallthru
        _
    $region24: #{token_fn_context.1} parent=5 // pred_fallthru
      _
    %p225 = scmp.le.s32.totalorder 2, %s7
    // Predicated region
    $region33: #{token_fn_context.1} parent=5 // pred_check
      %p226 = pneg %p225
    $region34: #{token_fn_context.1} parent=5 // pred_check_branch
      %228 = sbr.rel (%p226) target = $region36
    $region35: #{token_fn_context.1} parent=5 // pred_region
      %s229 = ssub.s32 %s7, 2
      // Predicated region
      $region37: #{token_fn_context.1} parent=35 // pred_check
        %p230 = pneg %p78
      $region38: #{token_fn_context.1} parent=35 // pred_check_branch
        %232 = sbr.rel (%p230) target = $region40
      $region39: #{token_fn_context.1} parent=35 // pred_region
        %p233 = scmp.lt.s32.totalorder %s18, 1
        %s234 = scalar_select %p233, %s18, 1
        %p235 = scmp.lt.s32.totalorder %s19, 0
        %s236 = scalar_select %p235, %s19, 0
        %s237 = smul.addr %s236, 2
        %s238 = smul.addr %s234, 2
        %s239 = sadd.s32 %s237, %s238
        %s240 = scalar_lea.vmem %s1, %s239
      $region40: #{token_fn_context.1} parent=35 // pred_fallthru
        _
    $region36: #{token_fn_context.1} parent=5 // pred_fallthru
      _
  $region6: #{token_fn_context.1} parent=0 // loop_footer
    %s11 = sadd.s32 1, %s7
  $region7: #{token_fn_context.1} parent=0 // loop_footer_branch
    %6 = sbr.rel target = $region3
  $region8: #{token_fn_context.1} parent=0 // loop_exit
    _

</llo_original>
